<compile_context>
chip_gen: v6e
topology: v6e:2x2x1
jax: 0.10.0
libtpu: 0.0.40
codegen_flags: <defaults>
</compile_context>

<pallas_src>
import functools
import math

import jax
import jax.numpy as jnp
from jax.experimental import pallas as pl
from jax.experimental.pallas import tpu as pltpu


def _round_up(x, m):
    return ((x + m - 1) // m) * m


def _actgcnii_kernel(adj_ref, xk_ref, init_x_ref, xres_ref, wT_ref, b_ref,
                     out_ref, acc_ref, *, alpha, beta, residual):
    k = pl.program_id(1)

    @pl.when(k == 0)
    def _():
        acc_ref[...] = jnp.zeros_like(acc_ref)

    # Steady state: pure MXU + DMA (bf16 inputs, f32 accumulation).
    acc_ref[...] += jnp.dot(adj_ref[...], xk_ref[...],
                            preferred_element_type=jnp.float32)

    @pl.when(k == pl.num_programs(1) - 1)
    def _():
        # Epilogue: initial-residual mix, linear (W pre-transposed), beta mix.
        hidden = (1.0 - alpha) * acc_ref[...] + alpha * init_x_ref[...]
        lin = jnp.dot(hidden, wT_ref[...],
                      preferred_element_type=jnp.float32) + b_ref[...]
        h = beta * lin + (1.0 - beta) * hidden
        if residual:
            h = h + xres_ref[...]
        out_ref[...] = h.astype(out_ref.dtype)


def actgcnii_forward(adj_norm, x, init_x, weight, bias, *,
                     alpha=0.1, beta=1.0, residual=False,
                     tm=256, tk=512, spmm_dtype=jnp.bfloat16,
                     vmem_limit_bytes=32 * 1024 * 1024):
    """adj_norm: (N, N), x/init_x: (N, C), weight: (C, C) [out,in], bias: (C,)."""
    N, C = x.shape
    f32 = jnp.float32

    # Lane-dense channel padding and tile-aligned row padding.
    c_pad = _round_up(C, 128)
    tm = min(tm, _round_up(N, 8))
    tk = min(tk, _round_up(N, 128))
    n_m = _round_up(N, tm)      # padded rows for the output / adjacency rows
    n_k = _round_up(N, tk)      # padded reduction dim (adjacency cols / x rows)

    adj_p = jnp.zeros((n_m, n_k), spmm_dtype).at[:N, :N].set(
        adj_norm.astype(spmm_dtype))
    xk_p = jnp.zeros((n_k, c_pad), spmm_dtype).at[:N, :C].set(
        x.astype(spmm_dtype))
    init_p = jnp.zeros((n_m, c_pad), f32).at[:N, :C].set(init_x.astype(f32))
    xres_p = jnp.zeros((n_m, c_pad), f32).at[:N, :C].set(x.astype(f32))
    wT_p = jnp.zeros((c_pad, c_pad), f32).at[:C, :C].set(weight.astype(f32).T)
    b_p = jnp.zeros((1, c_pad), f32).at[0, :C].set(bias.astype(f32))

    kernel = functools.partial(_actgcnii_kernel, alpha=float(alpha),
                               beta=float(beta), residual=bool(residual))

    grid = (n_m // tm, n_k // tk)

    out_p = pl.pallas_call(
        kernel,
        out_shape=jax.ShapeDtypeStruct((n_m, c_pad), x.dtype),
        grid_spec=pltpu.PrefetchScalarGridSpec(
            num_scalar_prefetch=0,
            grid=grid,
            in_specs=[
                pl.BlockSpec((tm, tk), lambda i, k: (i, k)),        # adjacency
                pl.BlockSpec((tk, c_pad), lambda i, k: (k, 0)),     # x (spmm RHS)
                pl.BlockSpec((tm, c_pad), lambda i, k: (i, 0)),     # init_x row tile
                pl.BlockSpec((tm, c_pad), lambda i, k: (i, 0)),     # x row tile (residual)
                pl.BlockSpec((c_pad, c_pad), lambda i, k: (0, 0)),  # W^T (resident)
                pl.BlockSpec((1, c_pad), lambda i, k: (0, 0)),      # bias (resident)
            ],
            out_specs=pl.BlockSpec((tm, c_pad), lambda i, k: (i, 0)),
            scratch_shapes=[pltpu.VMEM((tm, c_pad), jnp.float32)],
        ),
        compiler_params=pltpu.CompilerParams(
            dimension_semantics=("parallel", "arbitrary"),
            vmem_limit_bytes=vmem_limit_bytes),
    )(adj_p, xk_p, init_p, xres_p, wT_p, b_p)

    return out_p[:N, :C]


def _sym_norm_adjacency(key, n_nodes, p_edge=0.15, dtype=jnp.float32):
    """Random undirected graph with self-loops, symmetric normalization."""
    m = (jax.random.uniform(key, (n_nodes, n_nodes)) < p_edge).astype(dtype)
    a = jnp.maximum(m, m.T)                       # undirected
    a = a + jnp.eye(n_nodes, dtype=dtype)         # self loops
    deg = jnp.sum(a, axis=1)
    d_inv_sqrt = 1.0 / jnp.sqrt(deg)
    return (d_inv_sqrt[:, None] * a) * d_inv_sqrt[None, :]


def _reference(adj_norm, x, init_x, weight, bias, alpha, beta, residual):
    hidden = adj_norm @ x
    hidden = (1.0 - alpha) * hidden + alpha * init_x
    h = beta * (hidden @ weight.T + bias) + (1.0 - beta) * hidden
    if residual:
        h = h + x
    return h


def _make_inputs(key, n, c):
    k_adj, k_x, k_x0, k_w, k_b = jax.random.split(key, 5)
    adj_norm = _sym_norm_adjacency(k_adj, n)
    x = jax.random.normal(k_x, (n, c), dtype=jnp.float32)
    init_x = jax.random.normal(k_x0, (n, c), dtype=jnp.float32)
    # Deterministic parameter init matching reset_parameters():
    stdv = 1.0 / math.sqrt(c)
    weight = jax.random.uniform(k_w, (c, c), minval=-stdv, maxval=stdv,
                                dtype=jnp.float32)
    bias = jax.random.uniform(k_b, (c,), minval=-stdv, maxval=stdv,
                              dtype=jnp.float32)
    return adj_norm, x, init_x, weight, bias


if __name__ == "__main__":
    key = jax.random.PRNGKey(0)
    k1, k2 = jax.random.split(key)

    # Test 1: small aligned shapes, default hyper-params (matches module defaults).
    N, C = 64, 32
    adj_norm, x, init_x, weight, bias = _make_inputs(k1, N, C)
    out = actgcnii_forward(adj_norm, x, init_x, weight, bias,
                           alpha=0.1, beta=1.0, residual=False)
    out = jax.block_until_ready(out)
    ref = _reference(adj_norm, x, init_x, weight, bias, 0.1, 1.0, False)
    assert out.shape == (N, C)
    # bf16 spmm inputs / f32 accumulation -> loosened tolerance vs f32 reference.
    assert jnp.allclose(out, ref, atol=1e-2, rtol=1e-2), "mismatch vs reference (1)"

    # Test 2: unaligned N/C exercising padding, multi-tile grid, residual path.
    N2, C2 = 300, 48
    adj2, x2, init2, w2, b2 = _make_inputs(k2, N2, C2)
    out2 = actgcnii_forward(adj2, x2, init2, w2, b2,
                            alpha=0.2, beta=0.5, residual=True,
                            tm=128, tk=128)
    out2 = jax.block_until_ready(out2)
    ref2 = _reference(adj2, x2, init2, w2, b2, 0.2, 0.5, True)
    assert out2.shape == (N2, C2)
    assert jnp.allclose(out2, ref2, atol=1e-2, rtol=1e-2), "mismatch vs reference (2)"

    print("KERNEL_OK")
</pallas_src>

<mosaic_0001>
module attributes {stable_mosaic.version = 11 : i64} {
  func.func @_actgcnii_kernel(%arg0: i32, %arg1: i32, %arg2: memref<64x128xbf16, #tpu.memory_space<vmem>>, %arg3: memref<128x128xbf16, #tpu.memory_space<vmem>>, %arg4: memref<64x128xf32, #tpu.memory_space<vmem>>, %arg5: memref<64x128xf32, #tpu.memory_space<vmem>>, %arg6: memref<128x128xf32, #tpu.memory_space<vmem>>, %arg7: memref<1x128xf32, #tpu.memory_space<vmem>>, %arg8: memref<64x128xf32, #tpu.memory_space<vmem>>, %arg9: memref<64x128xf32, #tpu.memory_space<vmem>>) attributes {dimension_semantics = [#tpu.dimension_semantics<parallel>, #tpu.dimension_semantics<arbitrary>], iteration_bounds = array<i64: 1, 1>, scalar_prefetch = 0 : i64, scratch_operands = 1 : i64, tpu.core_type = #tpu.core_type<tc>, window_params = [{transform_indices = @transform_0, window_bounds = array<i64: 64, 128>}, {transform_indices = @transform_1, window_bounds = array<i64: 128, 128>}, {transform_indices = @transform_2, window_bounds = array<i64: 64, 128>}, {transform_indices = @transform_3, window_bounds = array<i64: 64, 128>}, {pipeline_mode = #tpu.pipeline_mode<synchronous>, transform_indices = @transform_4, window_bounds = array<i64: 128, 128>}, {pipeline_mode = #tpu.pipeline_mode<synchronous>, transform_indices = @transform_5, window_bounds = array<i64: 1, 128>}, {transform_indices = @transform_6, window_bounds = array<i64: 64, 128>}]} {
    %c0_i32 = arith.constant 0 : i32
    %0 = arith.cmpi eq, %arg1, %c0_i32 : i32
    %1 = arith.extui %0 : i1 to i32
    %c0_i32_0 = arith.constant 0 : i32
    %2 = arith.cmpi ne, %1, %c0_i32_0 : i32
    scf.if %2 {
      %cst_10 = arith.constant 0.000000e+00 : f32
      %12 = vector.broadcast %cst_10 : f32 to vector<64x128xf32>
      %c0_11 = arith.constant 0 : index
      %c0_12 = arith.constant 0 : index
      %13 = vector.load %arg9[%c0_11, %c0_12] : memref<64x128xf32, #tpu.memory_space<vmem>>, vector<64x128xf32>
      tpu.vector_store %arg9[%c0_11, %c0_12], %12 {strides = array<i32>} : memref<64x128xf32, #tpu.memory_space<vmem>>, vector<64x128xf32>,
    } else {
    }
    %c0 = arith.constant 0 : index
    %c0_1 = arith.constant 0 : index
    %3 = vector.load %arg9[%c0, %c0_1] : memref<64x128xf32, #tpu.memory_space<vmem>>, vector<64x128xf32>
    %c0_2 = arith.constant 0 : index
    %c0_3 = arith.constant 0 : index
    %4 = vector.load %arg2[%c0_2, %c0_3] : memref<64x128xbf16, #tpu.memory_space<vmem>>, vector<64x128xbf16>
    %c0_4 = arith.constant 0 : index
    %c0_5 = arith.constant 0 : index
    %5 = vector.load %arg3[%c0_4, %c0_5] : memref<128x128xbf16, #tpu.memory_space<vmem>>, vector<128x128xbf16>
    %cst = arith.constant dense<0.000000e+00> : vector<64x128xf32>
    %6 = tpu.matmul %4, %5, %cst {dimension_numbers = #tpu.dot_dimension_numbers<[1], [0], [0], [1], [0, 0, 1, 1], [], []>} : vector<64x128xbf16>, vector<128x128xbf16>, vector<64x128xf32> -> vector<64x128xf32>
    %7 = arith.addf %3, %6 : vector<64x128xf32>
    %c0_6 = arith.constant 0 : index
    %c0_7 = arith.constant 0 : index
    %8 = vector.load %arg9[%c0_6, %c0_7] : memref<64x128xf32, #tpu.memory_space<vmem>>, vector<64x128xf32>
    tpu.vector_store %arg9[%c0_6, %c0_7], %7 {strides = array<i32>} : memref<64x128xf32, #tpu.memory_space<vmem>>, vector<64x128xf32>,
    %c0_i32_8 = arith.constant 0 : i32
    %9 = arith.cmpi eq, %arg1, %c0_i32_8 : i32
    %10 = arith.extui %9 : i1 to i32
    %c0_i32_9 = arith.constant 0 : i32
    %11 = arith.cmpi ne, %10, %c0_i32_9 : i32
    scf.if %11 {
      %c0_10 = arith.constant 0 : index
      %c0_11 = arith.constant 0 : index
      %12 = vector.load %arg9[%c0_10, %c0_11] : memref<64x128xf32, #tpu.memory_space<vmem>>, vector<64x128xf32>
      %cst_12 = arith.constant 0.899999976 : f32
      %13 = vector.broadcast %cst_12 : f32 to vector<64x128xf32>
      %14 = arith.mulf %13, %12 : vector<64x128xf32>
      %c0_13 = arith.constant 0 : index
      %c0_14 = arith.constant 0 : index
      %15 = vector.load %arg4[%c0_13, %c0_14] : memref<64x128xf32, #tpu.memory_space<vmem>>, vector<64x128xf32>
      %cst_15 = arith.constant 1.000000e-01 : f32
      %16 = vector.broadcast %cst_15 : f32 to vector<64x128xf32>
      %17 = arith.mulf %16, %15 : vector<64x128xf32>
      %18 = arith.addf %14, %17 : vector<64x128xf32>
      %c0_16 = arith.constant 0 : index
      %c0_17 = arith.constant 0 : index
      %19 = vector.load %arg6[%c0_16, %c0_17] : memref<128x128xf32, #tpu.memory_space<vmem>>, vector<128x128xf32>
      %cst_18 = arith.constant dense<0.000000e+00> : vector<64x128xf32>
      %20 = tpu.matmul %18, %19, %cst_18 {dimension_numbers = #tpu.dot_dimension_numbers<[1], [0], [0], [1], [0, 0, 1, 1], [], []>} : vector<64x128xf32>, vector<128x128xf32>, vector<64x128xf32> -> vector<64x128xf32>
      %c0_19 = arith.constant 0 : index
      %c0_20 = arith.constant 0 : index
      %21 = vector.load %arg7[%c0_19, %c0_20] : memref<1x128xf32, #tpu.memory_space<vmem>>, vector<1x128xf32>
      %22 = vector.broadcast %21 : vector<1x128xf32> to vector<64x128xf32>
      %23 = arith.addf %20, %22 : vector<64x128xf32>
      %cst_21 = arith.constant 1.000000e+00 : f32
      %24 = vector.broadcast %cst_21 : f32 to vector<64x128xf32>
      %25 = arith.mulf %24, %23 : vector<64x128xf32>
      %cst_22 = arith.constant 0.000000e+00 : f32
      %26 = vector.broadcast %cst_22 : f32 to vector<64x128xf32>
      %27 = arith.mulf %26, %18 : vector<64x128xf32>
      %28 = arith.addf %25, %27 : vector<64x128xf32>
      %c0_23 = arith.constant 0 : index
      %c0_24 = arith.constant 0 : index
      %29 = vector.load %arg8[%c0_23, %c0_24] : memref<64x128xf32, #tpu.memory_space<vmem>>, vector<64x128xf32>
      tpu.vector_store %arg8[%c0_23, %c0_24], %28 {strides = array<i32>} : memref<64x128xf32, #tpu.memory_space<vmem>>, vector<64x128xf32>,
    } else {
    }
    return
  }
  func.func @transform_0(%arg0: i32, %arg1: i32) -> (i32, i32) {
    %c0_i32 = arith.constant 0 : i32
    return %arg0, %arg1 : i32, i32
  }
  func.func @transform_1(%arg0: i32, %arg1: i32) -> (i32, i32) {
    %c0_i32 = arith.constant 0 : i32
    %c0_i32_0 = arith.constant 0 : i32
    return %arg1, %c0_i32 : i32, i32
  }
  func.func @transform_2(%arg0: i32, %arg1: i32) -> (i32, i32) {
    %c0_i32 = arith.constant 0 : i32
    %c0_i32_0 = arith.constant 0 : i32
    return %arg0, %c0_i32 : i32, i32
  }
  func.func @transform_3(%arg0: i32, %arg1: i32) -> (i32, i32) {
    %c0_i32 = arith.constant 0 : i32
    %c0_i32_0 = arith.constant 0 : i32
    return %arg0, %c0_i32 : i32, i32
  }
  func.func @transform_4(%arg0: i32, %arg1: i32) -> (i32, i32) {
    %c0_i32 = arith.constant 0 : i32
    %c0_i32_0 = arith.constant 0 : i32
    %c0_i32_1 = arith.constant 0 : i32
    return %c0_i32, %c0_i32_0 : i32, i32
  }
  func.func @transform_5(%arg0: i32, %arg1: i32) -> (i32, i32) {
    %c0_i32 = arith.constant 0 : i32
    %c0_i32_0 = arith.constant 0 : i32
    %c0_i32_1 = arith.constant 0 : i32
    return %c0_i32, %c0_i32_0 : i32, i32
  }
  func.func @transform_6(%arg0: i32, %arg1: i32) -> (i32, i32) {
    %c0_i32 = arith.constant 0 : i32
    %c0_i32_0 = arith.constant 0 : i32
    return %arg0, %c0_i32 : i32, i32
  }
}

</mosaic_0001>

<llo_original>
// kernel: tpu_custom_call.1
$region0: #{tpu_custom_call.1}
  #allocation0 [shape = 'u32[]', space=smem, size = 0x4, offset = 0x4, fixed_abs, tag = 'smem constant byte address 0x4 - core index']
  #allocation1 [shape = 'u32[144,128]{1,0:T(1,128)}', space=vmem, size = 0x12000, scoped, tag = 'internal scratch']
  #allocation2 [shape = 'f32[64,128]{1,0:T(8,128)}', space=vmem, size = 0x8000, scoped, tag = 'scratch operand']
  %s0 = inlined_call_operand.hbm [shape: bf16[64,128], index: 0, kind: input, shape index: {}]
  %s1 = inlined_call_operand.hbm [shape: bf16[128,128], index: 1, kind: input, shape index: {}]
  %s2 = inlined_call_operand.hbm [shape: f32[64,128], index: 2, kind: input, shape index: {}]
  %s3 = inlined_call_operand.hbm [shape: f32[64,128], index: 3, kind: input, shape index: {}]
  %s4 = inlined_call_operand.hbm [shape: f32[128,128], index: 4, kind: input, shape index: {}]
  %s5 = inlined_call_operand.vmem [shape: f32[1,128], index: 5, kind: input, shape index: {}]
  %s6 = inlined_call_operand.hbm [shape: f32[64,128], index: 6, kind: output, shape index: {}]
  %s7 = sld [smem:[#allocation0]]
  $region62: #{tpu_custom_call.1} parent=0
    _
  %s9 = ssub.s32 1, %s7
  %s10 = scalar_select 0, %s9, %s7
  $region1: #{tpu_custom_call.1} parent=0
    #allocation3 [shape = 'u8[16384]{0}', space=vmem, size = 0x4000, scoped, tag = 'input window, operand 0, single buffered']
    #allocation4 [shape = 's32[1]{0}', space=sflag, size = 0x4, scoped, tag = 'scoped memory for tpu_custom_call.1']
    #allocation5 [shape = 's32[1]{0}', space=sflag, size = 0x4, scoped, tag = 'scoped memory for tpu_custom_call.1']
    #allocation6 [shape = 'u8[32768]{0}', space=vmem, size = 0x8000, scoped, tag = 'input window, operand 1, single buffered']
    #allocation7 [shape = 's32[1]{0}', space=sflag, size = 0x4, scoped, tag = 'scoped memory for tpu_custom_call.1']
    #allocation8 [shape = 'u8[32768]{0}', space=vmem, size = 0x8000, scoped, tag = 'input window, operand 2, single buffered']
    #allocation9 [shape = 'u8[32768]{0}', space=vmem, size = 0x8000, scoped, tag = 'input window, operand 3, single buffered']
    #allocation10 [shape = 's32[1]{0}', space=sflag, size = 0x4, scoped, tag = 'scoped memory for tpu_custom_call.1']
    #allocation11 [shape = 'u8[65536]{0}', space=vmem, size = 0x10000, scoped, tag = 'input window, operand 4, single buffered']
    #allocation12 [shape = 'u8[32768]{0}', space=vmem, size = 0x8000, scoped, tag = 'output window, operand 0, single buffered']
    %11 = vsyncpa [#allocation4], 0
    %12 = vsyncpa [#allocation7], 0
    %13 = vsyncpa [#allocation10], 0
    %14 = vsyncpa [#allocation5], 0
    // Predicated region
    $region2: #{tpu_custom_call.1} parent=1 // pred_check
      _
    $region3: #{tpu_custom_call.1} parent=1 // pred_check_branch
      %16 = sbr.rel (0) target = $region5
    $region4: #{tpu_custom_call.1} parent=1 // pred_region
      %s18 = ssub.s32 512, 512
      %19 = vsyncadd [#allocation4], %s18
      %s20 = sshll.u32 [#allocation3], 4
      %s21 = int_to_ptr.vmem [resolvable:$true] %s20
      %26 = dma.hbm_to_vmem [thread:$0]  %s0, 512, %s21, [#allocation4], 64, 64, 4
    $region5: #{tpu_custom_call.1} parent=1 // pred_fallthru
      _
    // Predicated region
    $region6: #{tpu_custom_call.1} parent=1 // pred_check
      _
    $region7: #{tpu_custom_call.1} parent=1 // pred_check_branch
      %28 = sbr.rel (0) target = $region9
    $region8: #{tpu_custom_call.1} parent=1 // pred_region
      %s30 = ssub.s32 1024, 1024
      %31 = vsyncadd [#allocation7], %s30
      %s32 = sshll.u32 [#allocation6], 4
      %s33 = int_to_ptr.vmem [resolvable:$true] %s32
      %38 = dma.hbm_to_vmem [thread:$0]  %s1, 1024, %s33, [#allocation7], 64, 64, 4
    $region9: #{tpu_custom_call.1} parent=1 // pred_fallthru
      _
    // Predicated region
    $region10: #{tpu_custom_call.1} parent=1 // pred_check
      _
    $region11: #{tpu_custom_call.1} parent=1 // pred_check_branch
      %40 = sbr.rel (0) target = $region13
    $region12: #{tpu_custom_call.1} parent=1 // pred_region
      %s42 = ssub.s32 1024, 1024
      %43 = vsyncadd [#allocation7], %s42
      %s44 = sshll.u32 [#allocation8], 4
      %s45 = int_to_ptr.vmem [resolvable:$true] %s44
      %50 = dma.hbm_to_vmem [thread:$0]  %s2, 1024, %s45, [#allocation7], 128, 128, 8
    $region13: #{tpu_custom_call.1} parent=1 // pred_fallthru
      _
    // Predicated region
    $region14: #{tpu_custom_call.1} parent=1 // pred_check
      _
    $region15: #{tpu_custom_call.1} parent=1 // pred_check_branch
      %52 = sbr.rel (0) target = $region17
    $region16: #{tpu_custom_call.1} parent=1 // pred_region
      %s54 = ssub.s32 1024, 1024
      %55 = vsyncadd [#allocation10], %s54
      %s56 = sshll.u32 [#allocation9], 4
      %s57 = int_to_ptr.vmem [resolvable:$true] %s56
      %62 = dma.hbm_to_vmem [thread:$0]  %s3, 1024, %s57, [#allocation10], 128, 128, 8
    $region17: #{tpu_custom_call.1} parent=1 // pred_fallthru
      _
    // Predicated region
    $region18: #{tpu_custom_call.1} parent=1 // pred_check
      _
    $region19: #{tpu_custom_call.1} parent=1 // pred_check_branch
      %64 = sbr.rel (0) target = $region21
    $region20: #{tpu_custom_call.1} parent=1 // pred_region
      %s66 = ssub.s32 2048, 2048
      %67 = vsyncadd [#allocation10], %s66
      %s68 = sshll.u32 [#allocation11], 4
      %s69 = int_to_ptr.vmem [resolvable:$true] %s68
      %74 = dma.hbm_to_vmem [thread:$0]  %s4, 2048, %s69, [#allocation10], 128, 128, 8
    $region21: #{tpu_custom_call.1} parent=1 // pred_fallthru
      _
    // Predicated region
    $region22: #{tpu_custom_call.1} parent=1 // pred_check
      _
    $region23: #{tpu_custom_call.1} parent=1 // pred_check_branch
      %76 = sbr.rel (0) target = $region25
    $region24: #{tpu_custom_call.1} parent=1 // pred_region
      _
    $region25: #{tpu_custom_call.1} parent=1 // pred_fallthru
      _
    // Predicated region
    $region26: #{tpu_custom_call.1} parent=1 // pred_check
      _
    $region27: #{tpu_custom_call.1} parent=1 // pred_check_branch
      %78 = sbr.rel (0) target = $region29
    $region28: #{tpu_custom_call.1} parent=1 // pred_region
      %79 = dma.done [#allocation4], 512
    $region29: #{tpu_custom_call.1} parent=1 // pred_fallthru
      _
    // Predicated region
    $region30: #{tpu_custom_call.1} parent=1 // pred_check
      _
    $region31: #{tpu_custom_call.1} parent=1 // pred_check_branch
      %81 = sbr.rel (0) target = $region33
    $region32: #{tpu_custom_call.1} parent=1 // pred_region
      %82 = dma.done [#allocation7], 1024
    $region33: #{tpu_custom_call.1} parent=1 // pred_fallthru
      _
    // Predicated region
    $region34: #{tpu_custom_call.1} parent=1 // pred_check
      _
    $region35: #{tpu_custom_call.1} parent=1 // pred_check_branch
      %84 = sbr.rel (0) target = $region37
    $region36: #{tpu_custom_call.1} parent=1 // pred_region
      %85 = dma.done [#allocation7], 1024
    $region37: #{tpu_custom_call.1} parent=1 // pred_fallthru
      _
    // Predicated region
    $region38: #{tpu_custom_call.1} parent=1 // pred_check
      _
    $region39: #{tpu_custom_call.1} parent=1 // pred_check_branch
      %87 = sbr.rel (0) target = $region41
    $region40: #{tpu_custom_call.1} parent=1 // pred_region
      %88 = dma.done [#allocation10], 1024
    $region41: #{tpu_custom_call.1} parent=1 // pred_fallthru
      _
    // Predicated region
    $region42: #{tpu_custom_call.1} parent=1 // pred_check
      _
    $region43: #{tpu_custom_call.1} parent=1 // pred_check_branch
      %90 = sbr.rel (0) target = $region45
    $region44: #{tpu_custom_call.1} parent=1 // pred_region
      %91 = dma.done [#allocation10], 2048
    $region45: #{tpu_custom_call.1} parent=1 // pred_fallthru
      _
    %p93 = scmp.eq.s32.totalorder 0, 0
    // Predicated region
    $region46: #{tpu_custom_call.1} parent=1 // pred_check
      %p94 = pneg %p93
    $region47: #{tpu_custom_call.1} parent=1 // pred_check_branch
      %96 = sbr.rel (%p94) target = $region49
    $region48: #{tpu_custom_call.1} parent=1 // pred_region
      %97 = vst [vmem:[#allocation2] sm:$0xff] 0.0
      %98 = vst [vmem:[#allocation2 + $0x8] sm:$0xff] 0.0
      %99 = vst [vmem:[#allocation2 + $0x10] sm:$0xff] 0.0
      %100 = vst [vmem:[#allocation2 + $0x18] sm:$0xff] 0.0
      %101 = vst [vmem:[#allocation2 + $0x20] sm:$0xff] 0.0
      %102 = vst [vmem:[#allocation2 + $0x28] sm:$0xff] 0.0
      %103 = vst [vmem:[#allocation2 + $0x30] sm:$0xff] 0.0
      %104 = vst [vmem:[#allocation2 + $0x38] sm:$0xff] 0.0
    $region49: #{tpu_custom_call.1} parent=1 // pred_fallthru
      _
    %v105 = vld [vmem:[#allocation2] sm:$0xff]
    %v106 = vld [vmem:[#allocation2 + $0x8] sm:$0xff]
    %v107 = vld [vmem:[#allocation2 + $0x10] sm:$0xff]
    %v108 = vld [vmem:[#allocation2 + $0x18] sm:$0xff]
    %v109 = vld [vmem:[#allocation2 + $0x20] sm:$0xff]
    %v110 = vld [vmem:[#allocation2 + $0x28] sm:$0xff]
    %v111 = vld [vmem:[#allocation2 + $0x30] sm:$0xff]
    %v112 = vld [vmem:[#allocation2 + $0x38] sm:$0xff]
    %v113 = vld [vmem:[#allocation3] sm:$0xf]
    %v114 = vld [vmem:[#allocation3 + $0x4] sm:$0xf]
    %v115 = vld [vmem:[#allocation3 + $0x8] sm:$0xf]
    %v116 = vld [vmem:[#allocation3 + $0xc] sm:$0xf]
    %v117 = vld [vmem:[#allocation3 + $0x10] sm:$0xf]
    %v118 = vld [vmem:[#allocation3 + $0x14] sm:$0xf]
    %v119 = vld [vmem:[#allocation3 + $0x18] sm:$0xf]
    %v120 = vld [vmem:[#allocation3 + $0x1c] sm:$0xf]
    %v121 = vld [vmem:[#allocation6] sm:$0xf]
    %v122 = vld [vmem:[#allocation6 + $0x4] sm:$0xf]
    %v123 = vld [vmem:[#allocation6 + $0x8] sm:$0xf]
    %v124 = vld [vmem:[#allocation6 + $0xc] sm:$0xf]
    %v125 = vld [vmem:[#allocation6 + $0x10] sm:$0xf]
    %v126 = vld [vmem:[#allocation6 + $0x14] sm:$0xf]
    %v127 = vld [vmem:[#allocation6 + $0x18] sm:$0xf]
    %v128 = vld [vmem:[#allocation6 + $0x1c] sm:$0xf]
    %v129 = vld [vmem:[#allocation6 + $0x20] sm:$0xf]
    %v130 = vld [vmem:[#allocation6 + $0x24] sm:$0xf]
    %v131 = vld [vmem:[#allocation6 + $0x28] sm:$0xf]
    %v132 = vld [vmem:[#allocation6 + $0x2c] sm:$0xf]
    %v133 = vld [vmem:[#allocation6 + $0x30] sm:$0xf]
    %v134 = vld [vmem:[#allocation6 + $0x34] sm:$0xf]
    %v135 = vld [vmem:[#allocation6 + $0x38] sm:$0xf]
    %v136 = vld [vmem:[#allocation6 + $0x3c] sm:$0xf]
    %v145 = vunpack.c.l.b16 %v113
    %v146 = vunpack.c.l.b16 %v114
    %v147 = vunpack.c.l.b16 %v115
    %v148 = vunpack.c.l.b16 %v116
    %v149 = vunpack.c.l.b16 %v117
    %v150 = vunpack.c.l.b16 %v118
    %v151 = vunpack.c.l.b16 %v119
    %v152 = vunpack.c.l.b16 %v120
    %v153 = vpack.c.b16 %v146, %v145
    %v154 = vpack.c.b16 %v148, %v147
    %v155 = vpack.c.b16 %v150, %v149
    %v156 = vpack.c.b16 %v152, %v151
    %v177 = vunpack.c.l.b16 %v121
    %v178 = vunpack.c.l.b16 %v122
    %v179 = vunpack.c.l.b16 %v123
    %v180 = vunpack.c.l.b16 %v124
    %v181 = vunpack.c.l.b16 %v125
    %v182 = vunpack.c.l.b16 %v126
    %v183 = vunpack.c.l.b16 %v127
    %v184 = vunpack.c.l.b16 %v128
    %v185 = vunpack.c.l.b16 %v129
    %v186 = vunpack.c.l.b16 %v130
    %v187 = vunpack.c.l.b16 %v131
    %v188 = vunpack.c.l.b16 %v132
    %v189 = vunpack.c.l.b16 %v133
    %v190 = vunpack.c.l.b16 %v134
    %v191 = vunpack.c.l.b16 %v135
    %v192 = vunpack.c.l.b16 %v136
    %v193 = vpack.c.b16 %v178, %v177
    %v194 = vpack.c.b16 %v180, %v179
    %v195 = vpack.c.b16 %v182, %v181
    %v196 = vpack.c.b16 %v184, %v183
    %v197 = vpack.c.b16 %v186, %v185
    %v198 = vpack.c.b16 %v188, %v187
    %v199 = vpack.c.b16 %v190, %v189
    %v200 = vpack.c.b16 %v192, %v191
    %209 = vmatprep.subr.bf16.mxu0 0
    %210 = vmatpush1.bf16.msra.mxu0 %v200
    %211 = vmatprep.subr.bf16.mxu0 0
    %212 = vmatpush1.bf16.msra.mxu0 %v199
    %213 = vmatprep.subr.bf16.mxu0 0
    %214 = vmatpush1.bf16.msra.mxu0 %v198
    %215 = vmatprep.subr.bf16.mxu0 0
    %216 = vmatpush1.bf16.msra.mxu0 %v197
    %217 = vmatprep.subr.bf16.mxu0 0
    %218 = vmatpush1.bf16.msra.mxu0 %v196
    %219 = vmatprep.subr.bf16.mxu0 0
    %220 = vmatpush1.bf16.msra.mxu0 %v195
    %221 = vmatprep.subr.bf16.mxu0 0
    %222 = vmatpush1.bf16.msra.mxu0 %v194
    %223 = vmatprep.subr.bf16.mxu0 0
    %224 = vmatpush1.bf16.msra.mxu0 %v193
    %225 = vmatprep.subr.bf16.mxu0 0
    %226 = vmatpush2.bf16.msra.mxu0 0
    %227 = vmatprep.subr.bf16.mxu0 0
    %228 = vmatpush2.bf16.msra.mxu0 0
    %229 = vmatprep.subr.bf16.mxu0 0
    %230 = vmatpush2.bf16.msra.mxu0 0
    %231 = vmatprep.subr.bf16.mxu0 0
    %232 = vmatpush2.bf16.msra.mxu0 0
    %233 = vmatprep.subr.bf16.mxu0 0
    %234 = vmatpush2.bf16.msra.mxu0 0
    %235 = vmatprep.subr.bf16.mxu0 0
    %236 = vmatpush2.bf16.msra.mxu0 0
    %237 = vmatprep.subr.bf16.mxu0 0
    %238 = vmatpush2.bf16.msra.mxu0 0
    %239 = vmatprep.subr.bf16.mxu0 0
    %240 = vmatpush2.bf16.msra.mxu0 0
    %241 = vmatprep.mubr.bf16.mxu0 0
    %242 = vmatmul.mubr.bf16.gmra.mxu0 %v153
    %v243 = vpop.f32.mrf.mxu0
    %v244 = vadd.f32 0.0, %v243
    %v245 = vpop.f32.mrf.mxu0
    %v246 = vpop.f32.mrf.mxu0
    %v247 = vadd.f32 0.0, %v246
    %v248 = vpop.f32.mrf.mxu0
    %249 = vmatprep.mubr.bf16.mxu0 0
    %250 = vmatmul.mubr.bf16.gmra.mxu0 %v154
    %v251 = vpop.f32.mrf.mxu0
    %v252 = vadd.f32 0.0, %v251
    %v253 = vpop.f32.mrf.mxu0
    %v254 = vpop.f32.mrf.mxu0
    %v255 = vadd.f32 0.0, %v254
    %v256 = vpop.f32.mrf.mxu0
    %257 = vmatprep.mubr.bf16.mxu0 0
    %258 = vmatmul.mubr.bf16.gmra.mxu0 %v155
    %v259 = vpop.f32.mrf.mxu0
    %v260 = vadd.f32 0.0, %v259
    %v261 = vpop.f32.mrf.mxu0
    %v262 = vpop.f32.mrf.mxu0
    %v263 = vadd.f32 0.0, %v262
    %v264 = vpop.f32.mrf.mxu0
    %265 = vmatprep.mubr.bf16.mxu0 0
    %266 = vmatmul.mubr.bf16.gmra.mxu0 %v156
    %v267 = vpop.f32.mrf.mxu0
    %v268 = vadd.f32 0.0, %v267
    %v269 = vpop.f32.mrf.mxu0
    %v270 = vpop.f32.mrf.mxu0
    %v271 = vadd.f32 0.0, %v270
    %v272 = vpop.f32.mrf.mxu0
    %273 = vdwg.mxu0
    %v274 = vadd.f32 %v105, %v244
    %v275 = vadd.f32 %v106, %v247
    %v276 = vadd.f32 %v107, %v252
    %v277 = vadd.f32 %v108, %v255
    %v278 = vadd.f32 %v109, %v260
    %v279 = vadd.f32 %v110, %v263
    %v280 = vadd.f32 %v111, %v268
    %v281 = vadd.f32 %v112, %v271
    %282 = vst [vmem:[#allocation2] sm:$0xff] %v274
    %283 = vst [vmem:[#allocation2 + $0x8] sm:$0xff] %v275
    %284 = vst [vmem:[#allocation2 + $0x10] sm:$0xff] %v276
    %285 = vst [vmem:[#allocation2 + $0x18] sm:$0xff] %v277
    %286 = vst [vmem:[#allocation2 + $0x20] sm:$0xff] %v278
    %287 = vst [vmem:[#allocation2 + $0x28] sm:$0xff] %v279
    %288 = vst [vmem:[#allocation2 + $0x30] sm:$0xff] %v280
    %289 = vst [vmem:[#allocation2 + $0x38] sm:$0xff] %v281
    // Predicated region
    $region50: #{tpu_custom_call.1} parent=1 // pred_check
      %p290 = pneg %p93
    $region51: #{tpu_custom_call.1} parent=1 // pred_check_branch
      %292 = sbr.rel (%p290) target = $region53
    $region52: #{tpu_custom_call.1} parent=1 // pred_region
      %v293 = vld [vmem:[#allocation2] sm:$0xff]
      %v294 = vld [vmem:[#allocation2 + $0x8] sm:$0xff]
      %v295 = vld [vmem:[#allocation2 + $0x10] sm:$0xff]
      %v296 = vld [vmem:[#allocation2 + $0x18] sm:$0xff]
      %v297 = vld [vmem:[#allocation2 + $0x20] sm:$0xff]
      %v298 = vld [vmem:[#allocation2 + $0x28] sm:$0xff]
      %v299 = vld [vmem:[#allocation2 + $0x30] sm:$0xff]
      %v300 = vld [vmem:[#allocation2 + $0x38] sm:$0xff]
      %v301 = vmul.f32 %v293, 0.9
      %v302 = vmul.f32 %v294, 0.9
      %v303 = vmul.f32 %v295, 0.9
      %v304 = vmul.f32 %v296, 0.9
      %v305 = vmul.f32 %v297, 0.9
      %v306 = vmul.f32 %v298, 0.9
      %v307 = vmul.f32 %v299, 0.9
      %v308 = vmul.f32 %v300, 0.9
      %v309 = vld [vmem:[#allocation8] sm:$0xff]
      %v310 = vld [vmem:[#allocation8 + $0x8] sm:$0xff]
      %v311 = vld [vmem:[#allocation8 + $0x10] sm:$0xff]
      %v312 = vld [vmem:[#allocation8 + $0x18] sm:$0xff]
      %v313 = vld [vmem:[#allocation8 + $0x20] sm:$0xff]
      %v314 = vld [vmem:[#allocation8 + $0x28] sm:$0xff]
      %v315 = vld [vmem:[#allocation8 + $0x30] sm:$0xff]
      %v316 = vld [vmem:[#allocation8 + $0x38] sm:$0xff]
      %v317 = vmul.f32 %v309, 0.1
      %v318 = vmul.f32 %v310, 0.1
      %v319 = vmul.f32 %v311, 0.1
      %v320 = vmul.f32 %v312, 0.1
      %v321 = vmul.f32 %v313, 0.1
      %v322 = vmul.f32 %v314, 0.1
      %v323 = vmul.f32 %v315, 0.1
      %v324 = vmul.f32 %v316, 0.1
      %v325 = vadd.f32 %v301, %v317
      %v326 = vadd.f32 %v302, %v318
      %v327 = vadd.f32 %v303, %v319
      %v328 = vadd.f32 %v304, %v320
      %v329 = vadd.f32 %v305, %v321
      %v330 = vadd.f32 %v306, %v322
      %v331 = vadd.f32 %v307, %v323
      %v332 = vadd.f32 %v308, %v324
      %v333 = vld [vmem:[#allocation11] sm:$0xff]
      %v334 = vld [vmem:[#allocation11 + $0x8] sm:$0xff]
      %v335 = vld [vmem:[#allocation11 + $0x10] sm:$0xff]
      %v336 = vld [vmem:[#allocation11 + $0x18] sm:$0xff]
      %v337 = vld [vmem:[#allocation11 + $0x20] sm:$0xff]
      %v338 = vld [vmem:[#allocation11 + $0x28] sm:$0xff]
      %v339 = vld [vmem:[#allocation11 + $0x30] sm:$0xff]
      %v340 = vld [vmem:[#allocation11 + $0x38] sm:$0xff]
      %v341 = vld [vmem:[#allocation11 + $0x40] sm:$0xff]
      %v342 = vld [vmem:[#allocation11 + $0x48] sm:$0xff]
      %v343 = vld [vmem:[#allocation11 + $0x50] sm:$0xff]
      %v344 = vld [vmem:[#allocation11 + $0x58] sm:$0xff]
      %v345 = vld [vmem:[#allocation11 + $0x60] sm:$0xff]
      %v346 = vld [vmem:[#allocation11 + $0x68] sm:$0xff]
      %v347 = vld [vmem:[#allocation11 + $0x70] sm:$0xff]
      %v348 = vld [vmem:[#allocation11 + $0x78] sm:$0xff]
      %v349 = vld [vmem:[%s5] sm:$0x1]
      %v351 = vlaneseq
      %v352 = vshrl.u32 %v351, 7
      %v353 = vsub.s32 0, %v352
      %v354 = vrot.slane %v349, %v353
      %356 = vmatprep.subr.mxu0 0.0
      %357 = vmatpush1.msra.mxu0 %v348
      %358 = vmatprep.subr.mxu0 0.0
      %359 = vmatpush1.msra.mxu0 %v347
      %360 = vmatprep.subr.mxu0 0.0
      %361 = vmatpush1.msra.mxu0 %v346
      %362 = vmatprep.subr.mxu0 0.0
      %363 = vmatpush1.msra.mxu0 %v345
      %364 = vmatprep.subr.mxu0 0.0
      %365 = vmatpush1.msra.mxu0 %v344
      %366 = vmatprep.subr.mxu0 0.0
      %367 = vmatpush1.msra.mxu0 %v343
      %368 = vmatprep.subr.mxu0 0.0
      %369 = vmatpush1.msra.mxu0 %v342
      %370 = vmatprep.subr.mxu0 0.0
      %371 = vmatpush1.msra.mxu0 %v341
      %372 = vmatprep.subr.mxu0 0.0
      %373 = vmatpush1.msra.mxu0 %v340
      %374 = vmatprep.subr.mxu0 0.0
      %375 = vmatpush1.msra.mxu0 %v339
      %376 = vmatprep.subr.mxu0 0.0
      %377 = vmatpush1.msra.mxu0 %v338
      %378 = vmatprep.subr.mxu0 0.0
      %379 = vmatpush1.msra.mxu0 %v337
      %380 = vmatprep.subr.mxu0 0.0
      %381 = vmatpush1.msra.mxu0 %v336
      %382 = vmatprep.subr.mxu0 0.0
      %383 = vmatpush1.msra.mxu0 %v335
      %384 = vmatprep.subr.mxu0 0.0
      %385 = vmatpush1.msra.mxu0 %v334
      %386 = vmatprep.subr.mxu0 0.0
      %387 = vmatpush1.msra.mxu0 %v333
      %388 = vmatprep.subr.mxu0 0.0
      %389 = vmatpush2.msra.mxu0 0.0
      %390 = vmatprep.subr.mxu0 0.0
      %391 = vmatpush2.msra.mxu0 0.0
      %392 = vmatprep.subr.mxu0 0.0
      %393 = vmatpush2.msra.mxu0 0.0
      %394 = vmatprep.subr.mxu0 0.0
      %395 = vmatpush2.msra.mxu0 0.0
      %396 = vmatprep.subr.mxu0 0.0
      %397 = vmatpush2.msra.mxu0 0.0
      %398 = vmatprep.subr.mxu0 0.0
      %399 = vmatpush2.msra.mxu0 0.0
      %400 = vmatprep.subr.mxu0 0.0
      %401 = vmatpush2.msra.mxu0 0.0
      %402 = vmatprep.subr.mxu0 0.0
      %403 = vmatpush2.msra.mxu0 0.0
      %404 = vmatprep.subr.mxu0 0.0
      %405 = vmatpush2.msra.mxu0 0.0
      %406 = vmatprep.subr.mxu0 0.0
      %407 = vmatpush2.msra.mxu0 0.0
      %408 = vmatprep.subr.mxu0 0.0
      %409 = vmatpush2.msra.mxu0 0.0
      %410 = vmatprep.subr.mxu0 0.0
      %411 = vmatpush2.msra.mxu0 0.0
      %412 = vmatprep.subr.mxu0 0.0
      %413 = vmatpush2.msra.mxu0 0.0
      %414 = vmatprep.subr.mxu0 0.0
      %415 = vmatpush2.msra.mxu0 0.0
      %416 = vmatprep.subr.mxu0 0.0
      %417 = vmatpush2.msra.mxu0 0.0
      %418 = vmatprep.subr.mxu0 0.0
      %419 = vmatpush2.msra.mxu0 0.0
      %420 = vmatprep.mubr.f32.mxu0 0.0
      %421 = vmatmul.mubr.f32.gmra.mxu0 %v325
      %v422 = vpop.f32.mrf.mxu0
      %v423 = vadd.f32 %v354, %v422
      %v424 = vpop.f32.mrf.mxu0
      %425 = vmatprep.mubr.f32.mxu0 0.0
      %426 = vmatmul.mubr.f32.gmra.mxu0 %v326
      %v427 = vpop.f32.mrf.mxu0
      %v428 = vadd.f32 %v354, %v427
      %v429 = vpop.f32.mrf.mxu0
      %430 = vmatprep.mubr.f32.mxu0 0.0
      %431 = vmatmul.mubr.f32.gmra.mxu0 %v327
      %v432 = vpop.f32.mrf.mxu0
      %v433 = vadd.f32 %v354, %v432
      %v434 = vpop.f32.mrf.mxu0
      %435 = vmatprep.mubr.f32.mxu0 0.0
      %436 = vmatmul.mubr.f32.gmra.mxu0 %v328
      %v437 = vpop.f32.mrf.mxu0
      %v438 = vadd.f32 %v354, %v437
      %v439 = vpop.f32.mrf.mxu0
      %440 = vmatprep.mubr.f32.mxu0 0.0
      %441 = vmatmul.mubr.f32.gmra.mxu0 %v329
      %v442 = vpop.f32.mrf.mxu0
      %v443 = vadd.f32 %v354, %v442
      %v444 = vpop.f32.mrf.mxu0
      %445 = vmatprep.mubr.f32.mxu0 0.0
      %446 = vmatmul.mubr.f32.gmra.mxu0 %v330
      %v447 = vpop.f32.mrf.mxu0
      %v448 = vadd.f32 %v354, %v447
      %v449 = vpop.f32.mrf.mxu0
      %450 = vmatprep.mubr.f32.mxu0 0.0
      %451 = vmatmul.mubr.f32.gmra.mxu0 %v331
      %v452 = vpop.f32.mrf.mxu0
      %v453 = vadd.f32 %v354, %v452
      %v454 = vpop.f32.mrf.mxu0
      %455 = vmatprep.mubr.f32.mxu0 0.0
      %456 = vmatmul.mubr.f32.gmra.mxu0 %v332
      %v457 = vpop.f32.mrf.mxu0
      %v458 = vadd.f32 %v354, %v457
      %v459 = vpop.f32.mrf.mxu0
      %460 = vdwg.mxu0
      %v461 = vmul.f32 %v325, 0.0
      %v462 = vmul.f32 %v326, 0.0
      %v463 = vmul.f32 %v327, 0.0
      %v464 = vmul.f32 %v328, 0.0
      %v465 = vmul.f32 %v329, 0.0
      %v466 = vmul.f32 %v330, 0.0
      %v467 = vmul.f32 %v331, 0.0
      %v468 = vmul.f32 %v332, 0.0
      %v469 = vadd.f32 %v423, %v461
      %v470 = vadd.f32 %v428, %v462
      %v471 = vadd.f32 %v433, %v463
      %v472 = vadd.f32 %v438, %v464
      %v473 = vadd.f32 %v443, %v465
      %v474 = vadd.f32 %v448, %v466
      %v475 = vadd.f32 %v453, %v467
      %v476 = vadd.f32 %v458, %v468
      %477 = vst [vmem:[#allocation12] sm:$0xff] %v469
      %478 = vst [vmem:[#allocation12 + $0x8] sm:$0xff] %v470
      %479 = vst [vmem:[#allocation12 + $0x10] sm:$0xff] %v471
      %480 = vst [vmem:[#allocation12 + $0x18] sm:$0xff] %v472
      %481 = vst [vmem:[#allocation12 + $0x20] sm:$0xff] %v473
      %482 = vst [vmem:[#allocation12 + $0x28] sm:$0xff] %v474
      %483 = vst [vmem:[#allocation12 + $0x30] sm:$0xff] %v475
      %484 = vst [vmem:[#allocation12 + $0x38] sm:$0xff] %v476
    $region53: #{tpu_custom_call.1} parent=1 // pred_fallthru
      _
    // Predicated region
    $region54: #{tpu_custom_call.1} parent=1 // pred_check
      _
    $region55: #{tpu_custom_call.1} parent=1 // pred_check_branch
      %486 = sbr.rel (0) target = $region57
    $region56: #{tpu_custom_call.1} parent=1 // pred_region
      %s488 = ssub.s32 1024, 1024
      %489 = vsyncadd [#allocation5], %s488
      %s490 = sshll.u32 [#allocation12], 4
      %s491 = int_to_ptr.vmem [resolvable:$true] %s490
      %496 = dma.vmem_to_hbm [thread:$0]  %s491, 1024, %s6, [#allocation5], 128, 128, 8
    $region57: #{tpu_custom_call.1} parent=1 // pred_fallthru
      _
    // Predicated region
    $region58: #{tpu_custom_call.1} parent=1 // pred_check
      _
    $region59: #{tpu_custom_call.1} parent=1 // pred_check_branch
      %498 = sbr.rel (0) target = $region61
    $region60: #{tpu_custom_call.1} parent=1 // pred_region
      %499 = dma.done [#allocation5], 1024
    $region61: #{tpu_custom_call.1} parent=1 // pred_fallthru
      _
    %500 = vsyncpa [#allocation4], 1
    %501 = vsyncpa [#allocation7], 1
    %502 = vsyncpa [#allocation10], 1
    %503 = vsyncpa [#allocation5], 1

</llo_original>
